<compile_context>
chip_gen: v7x
topology: tpu7x:2x2x1
jax: 0.10.0
libtpu: 0.0.40
codegen_flags: <defaults>
</compile_context>

<pallas_src>
import jax
import jax.numpy as jnp
from jax.experimental import pallas as pl
from jax.experimental.pallas import tpu as pltpu


def mlp_kernel(x_ref, w_ref, o_ref, acc_ref):
    """x_ref: (TB, TL) native dtype; w_ref: (1, TL) streamed or (n_l, 1, TL)
    resident f32; o_ref: (TB, 1) f32; acc_ref: (TB, 128) f32
    (or (TB, TL) when TL is not a multiple of 128 — single-L-step case)."""
    l = pl.program_id(1)

    @pl.when(l == 0)
    def _init():
        acc_ref[...] = jnp.zeros_like(acc_ref)

    tl = x_ref.shape[-1]
    n_chunks, rem = divmod(tl, 128)
    resident3d = len(w_ref.shape) == 3   # VMEM-resident folded weight (n_l, 1, TL)

    if rem != 0:
        # TL not a multiple of 128 (only happens for a single, full-extent L
        # step): accumulate the whole weighted tile; lanes reduced in finalize.
        xv = x_ref[...]
        if xv.dtype != jnp.float32:      # trace-time check; cast in-kernel only
            xv = xv.astype(jnp.float32)
        wv = w_ref[l] if resident3d else w_ref[...]
        acc_ref[...] += xv * wv
    else:
        # Hot path: 128-lane chunks, pure VPU multiply-adds into a (TB, 128)
        # partial, one accumulator read-modify-write per tile.  No cross-lane
        # (XLU) work inside the reduction loop.
        partial = None
        for k in range(n_chunks):
            sl = slice(k * 128, (k + 1) * 128)
            xk = x_ref[:, sl]
            if xk.dtype != jnp.float32:
                xk = xk.astype(jnp.float32)
            wk = w_ref[l, :, sl] if resident3d else w_ref[:, sl]
            term = xk * wk
            partial = term if partial is None else partial + term
        acc_ref[...] += partial

    @pl.when(l == pl.num_programs(1) - 1)
    def _finalize():
        # Single XLU cross-lane reduce + ReLU + store, once per B block.
        total = jnp.sum(acc_ref[...], axis=-1, keepdims=True)
        o_ref[...] = jnp.maximum(total, 0.0).astype(o_ref.dtype)


def _round_up(a: int, b: int) -> int:
    return ((a + b - 1) // b) * b


def _largest_div_mult(total: int, granule: int, hi: int):
    """Largest d <= hi with d % granule == 0 and total % d == 0, else None."""
    best = None
    for d in range(granule, hi + 1, granule):
        if total % d == 0:
            best = d
    return best


def mlp_forward(x_nchw, weight, *, tb_max=256, tl_target=8192):
    """x_nchw: (B, C, H, W) any float dtype; weight: (1, C) like
    nn.Linear(C, 1, bias=False).weight.  Returns (B, 1) f32."""
    B, C, H, W = (int(d) for d in x_nchw.shape)
    S = H * W
    L = C * S
    itemsize = jnp.dtype(x_nchw.dtype).itemsize

    # Fold the linear weight AND the 1/S mean scale into one per-element vector:
    #   w_eff[c*S + s] = weight[0, c] / S   (channel-major, matching the reshape).
    w_eff = weight.reshape(C, 1).astype(jnp.float32) / jnp.float32(S)
    w_eff = jnp.broadcast_to(w_eff, (C, S)).reshape(1, L)

    # Channel-major flatten, native dtype preserved (no wrapper-side cast).
    x2 = x_nchw.reshape(B, L)

    # ---- B tiling: full-extent or a multiple-of-8 divisor (no padding if possible)
    if B <= 8:
        TB, Bp = B, B                                     # full-extent block
    else:
        d = _largest_div_mult(B, 8, min(tb_max, B // 2))  # >=2 blocks when possible
        if d is not None:
            TB, Bp = d, B
        elif B <= tb_max:
            TB, Bp = B, B                                 # full extent, no pad
        else:
            TB, Bp = tb_max, _round_up(B, tb_max)         # rare pad fallback

    # ---- L tiling: multiple-of-128 divisor; cap so 2x x-tile stays <= ~16 MiB
    # (fits comfortably inside v7x's 64 MiB physical VMEM, trivially on v5e/v6e).
    cap = max(128, (8 * 1024 * 1024 // max(TB * itemsize, 1)) // 128 * 128)
    target = max(128, min(tl_target, cap))
    if L <= target:
        TL, Lp = L, L                                     # full-extent block
    else:
        d = _largest_div_mult(L, 128, target)
        if d is not None:
            TL, Lp = d, L                                 # divisor -> no pad
        else:
            TL = max(128, (target // 128) * 128)
            Lp = _round_up(L, TL)                         # rare pad fallback

    # Rare fallback padding: padded lanes multiply a zero weight; padded batch
    # rows produce relu(0) = 0 and are sliced off below.
    if (Bp, Lp) != (B, L):
        x2 = jnp.pad(x2, ((0, Bp - B), (0, Lp - L)))
    if Lp != L:
        w_eff = jnp.pad(w_eff, ((0, 0), (0, Lp - L)))

    n_b, n_l = Bp // TB, Lp // TL

    # ---- weight spec: fully VMEM-resident (constant block index) when small,
    # otherwise streamed (1, TL) per L step.
    resident_w = n_l > 1 and Lp * 4 <= 2 * 1024 * 1024
    if resident_w:
        w_arg = w_eff.reshape(n_l, 1, TL)
        w_spec = pl.BlockSpec((n_l, 1, TL), lambda i, l: (0, 0, 0))
        w_hbm_bytes = Lp * 4                      # read once
        w_vmem_bytes = Lp * 4
    elif n_l == 1:
        w_arg = w_eff
        w_spec = pl.BlockSpec((1, TL), lambda i, l: (0, 0))
        w_hbm_bytes = Lp * 4
        w_vmem_bytes = TL * 4
    else:
        w_arg = w_eff
        w_spec = pl.BlockSpec((1, TL), lambda i, l: (0, l))
        w_hbm_bytes = n_b * Lp * 4                # re-streamed per B block
        w_vmem_bytes = 2 * TL * 4                 # double-buffered

    acc_w = 128 if TL % 128 == 0 else TL          # wide VPU accumulator

    # VMEM budget: double-buffered x tiles + weight + accumulator + output,
    # with headroom; never above 48 MiB (v7x physical VMEM is 64 MiB).
    vmem_need = (2 * TB * TL * itemsize) + 2 * w_vmem_bytes + TB * acc_w * 4 + 2 * TB * 4
    vmem_limit = int(min(48 * 1024 * 1024, max(24 * 1024 * 1024,
                                               vmem_need + 8 * 1024 * 1024)))

    cost = pl.CostEstimate(
        flops=2 * Bp * Lp,                        # one mul + one add per element
        transcendentals=0,
        bytes_accessed=Bp * Lp * itemsize + w_hbm_bytes + Bp * 4,
    )

    out = pl.pallas_call(
        mlp_kernel,
        out_shape=jax.ShapeDtypeStruct((Bp, 1), jnp.float32),
        grid_spec=pltpu.PrefetchScalarGridSpec(
            num_scalar_prefetch=0,
            grid=(n_b, n_l),
            in_specs=[
                pl.BlockSpec((TB, TL), lambda i, l: (i, l)),   # x tile (native dtype)
                w_spec,                                        # folded weight
            ],
            out_specs=pl.BlockSpec((TB, 1), lambda i, l: (i, 0)),
            scratch_shapes=[pltpu.VMEM((TB, acc_w), jnp.float32)],
        ),
        compiler_params=pltpu.CompilerParams(
            # B blocks independent -> "parallel" (TC sharding on v7x); the L
            # reduction must stay the last, "arbitrary" axis (acc init/finalize
            # and the constant (i, 0) output index depend on it).
            dimension_semantics=("parallel", "arbitrary"),
            vmem_limit_bytes=vmem_limit,
        ),
        cost_estimate=cost,
    )(x2, w_arg)

    return out[:B] if Bp != B else out


if __name__ == "__main__":
    key = jax.random.PRNGKey(0)
    kx1, kw, kx2, kx3 = jax.random.split(key, 4)

    C = 2  # Linear(2, 1) in the module => 2 input channels
    bound = 1.0 / jnp.sqrt(jnp.float32(C))
    weight = jax.random.uniform(kw, (1, C), dtype=jnp.float32,
                                minval=-bound, maxval=bound)

    def reference(x):
        b, c, h, w = x.shape
        pooled = jnp.mean(x.reshape(b, c, h * w).astype(jnp.float32), axis=-1)
        return jnp.maximum(pooled @ weight.T, 0.0)

    # 1) Small batch; tl_target=128 forces a 4-step pipelined L reduction and
    #    exercises the VMEM-resident (n_l, 1, TL) weight path.
    x1 = jax.random.normal(kx1, (2, C, 16, 16), dtype=jnp.float32)
    out1 = jax.block_until_ready(mlp_forward(x1, weight, tl_target=128))
    assert out1.shape == (2, 1), out1.shape
    assert jnp.allclose(out1, reference(x1), atol=1e-5, rtol=1e-5)

    # 2) B=16 splits into two 8-row blocks (megacore-friendly parallel axis),
    #    single full-extent L step with multi-chunk VPU accumulation.
    x2 = jax.random.normal(kx2, (16, C, 16, 16), dtype=jnp.float32)
    out2 = jax.block_until_ready(mlp_forward(x2, weight))
    assert out2.shape == (16, 1), out2.shape
    assert jnp.allclose(out2, reference(x2), atol=1e-5, rtol=1e-5)

    # 3) bf16 input kept native into the kernel (in-kernel cast, f32 accumulate).
    x3 = jax.random.normal(kx3, (4, C, 32, 32), dtype=jnp.bfloat16)
    out3 = jax.block_until_ready(mlp_forward(x3, weight, tl_target=256))
    assert out3.shape == (4, 1), out3.shape
    assert jnp.allclose(out3, reference(x3), atol=1e-4, rtol=1e-4)

    print("KERNEL_OK")
</pallas_src>

<mosaic_0001>
module attributes {stable_mosaic.version = 11 : i64} {
  func.func @mlp_kernel(%arg0: i32, %arg1: i32, %arg2: memref<2x128xf32, #tpu.memory_space<vmem>>, %arg3: memref<4x1x128xf32, #tpu.memory_space<vmem>>, %arg4: memref<2x1xf32, #tpu.memory_space<vmem>>, %arg5: memref<2x128xf32, #tpu.memory_space<vmem>>) attributes {dimension_semantics = [#tpu.dimension_semantics<parallel>, #tpu.dimension_semantics<arbitrary>], iteration_bounds = array<i64: 1, 4>, scalar_prefetch = 0 : i64, scratch_operands = 1 : i64, tpu.core_type = #tpu.core_type<tc>, window_params = [{transform_indices = @transform_0, window_bounds = array<i64: 2, 128>}, {pipeline_mode = #tpu.pipeline_mode<synchronous>, transform_indices = @transform_1, window_bounds = array<i64: 4, 1, 128>}, {transform_indices = @transform_2, window_bounds = array<i64: 2, 1>}]} {
    %c0_i32 = arith.constant 0 : i32
    %0 = arith.cmpi eq, %arg1, %c0_i32 : i32
    %1 = arith.extui %0 : i1 to i32
    %c0_i32_0 = arith.constant 0 : i32
    %2 = arith.cmpi ne, %1, %c0_i32_0 : i32
    scf.if %2 {
      %cst = arith.constant 0.000000e+00 : f32
      %15 = vector.broadcast %cst : f32 to vector<2x128xf32>
      %c0_9 = arith.constant 0 : index
      %c0_10 = arith.constant 0 : index
      %16 = vector.load %arg5[%c0_9, %c0_10] : memref<2x128xf32, #tpu.memory_space<vmem>>, vector<2x128xf32>
      tpu.vector_store %arg5[%c0_9, %c0_10], %15 {strides = array<i32>} : memref<2x128xf32, #tpu.memory_space<vmem>>, vector<2x128xf32>,
    } else {
    }
    %c0 = arith.constant 0 : index
    %c0_1 = arith.constant 0 : index
    %3 = vector.load %arg2[%c0, %c0_1] : memref<2x128xf32, #tpu.memory_space<vmem>>, vector<2x128xf32>
    %4 = arith.index_cast %arg1 : i32 to index
    %c0_2 = arith.constant 0 : index
    %c0_3 = arith.constant 0 : index
    %5 = vector.load %arg3[%4, %c0_2, %c0_3] : memref<4x1x128xf32, #tpu.memory_space<vmem>>, vector<1x1x128xf32>
    %6 = vector.shape_cast %5 : vector<1x1x128xf32> to vector<1x128xf32>
    %7 = vector.broadcast %6 : vector<1x128xf32> to vector<2x128xf32>
    %8 = arith.mulf %3, %7 : vector<2x128xf32>
    %c0_4 = arith.constant 0 : index
    %c0_5 = arith.constant 0 : index
    %9 = vector.load %arg5[%c0_4, %c0_5] : memref<2x128xf32, #tpu.memory_space<vmem>>, vector<2x128xf32>
    %10 = arith.addf %9, %8 : vector<2x128xf32>
    %c0_6 = arith.constant 0 : index
    %c0_7 = arith.constant 0 : index
    %11 = vector.load %arg5[%c0_6, %c0_7] : memref<2x128xf32, #tpu.memory_space<vmem>>, vector<2x128xf32>
    tpu.vector_store %arg5[%c0_6, %c0_7], %10 {strides = array<i32>} : memref<2x128xf32, #tpu.memory_space<vmem>>, vector<2x128xf32>,
    %c3_i32 = arith.constant 3 : i32
    %12 = arith.cmpi eq, %arg1, %c3_i32 : i32
    %13 = arith.extui %12 : i1 to i32
    %c0_i32_8 = arith.constant 0 : i32
    %14 = arith.cmpi ne, %13, %c0_i32_8 : i32
    scf.if %14 {
      %c0_9 = arith.constant 0 : index
      %c0_10 = arith.constant 0 : index
      %15 = vector.load %arg5[%c0_9, %c0_10] : memref<2x128xf32, #tpu.memory_space<vmem>>, vector<2x128xf32>
      %cst = arith.constant dense<0.000000e+00> : vector<2xf32>
      %16 = vector.multi_reduction <add>, %15, %cst [1] : vector<2x128xf32> to vector<2xf32>
      %17 = vector.shape_cast %16 : vector<2xf32> to vector<2x1xf32>
      %cst_11 = arith.constant 0.000000e+00 : f32
      %18 = vector.broadcast %cst_11 : f32 to vector<2x1xf32>
      %19 = arith.maximumf %17, %18 : vector<2x1xf32>
      %c0_12 = arith.constant 0 : index
      %c0_13 = arith.constant 0 : index
      %20 = vector.load %arg4[%c0_12, %c0_13] : memref<2x1xf32, #tpu.memory_space<vmem>>, vector<2x1xf32>
      tpu.vector_store %arg4[%c0_12, %c0_13], %19 {strides = array<i32>} : memref<2x1xf32, #tpu.memory_space<vmem>>, vector<2x1xf32>,
    } else {
    }
    return
  }
  func.func @transform_0(%arg0: i32, %arg1: i32) -> (i32, i32) {
    %c0_i32 = arith.constant 0 : i32
    return %arg0, %arg1 : i32, i32
  }
  func.func @transform_1(%arg0: i32, %arg1: i32) -> (i32, i32, i32) {
    %c0_i32 = arith.constant 0 : i32
    %c0_i32_0 = arith.constant 0 : i32
    %c0_i32_1 = arith.constant 0 : i32
    %c0_i32_2 = arith.constant 0 : i32
    return %c0_i32, %c0_i32_0, %c0_i32_1 : i32, i32, i32
  }
  func.func @transform_2(%arg0: i32, %arg1: i32) -> (i32, i32) {
    %c0_i32 = arith.constant 0 : i32
    %c0_i32_0 = arith.constant 0 : i32
    return %arg0, %c0_i32 : i32, i32
  }
}

</mosaic_0001>

<llo_original>
// kernel: tpu_custom_call.1
$region0: #{tpu_custom_call.1}
  #allocation0 [shape = 'u32[]', space=smem, size = 0x4, offset = 0x4, fixed_abs, tag = 'smem constant byte address 0x4 - core index']
  #allocation1 [shape = 'u32[144,128]{1,0:T(1,128)}', space=vmem, size = 0x12000, scoped, tag = 'internal scratch']
  #allocation2 [shape = 'f32[2,128]{1,0:T(2,128)}', space=vmem, size = 0x400, scoped, tag = 'scratch operand']
  %s0 = inlined_call_operand.hbm [shape: f32[2,512], index: 0, kind: input, shape index: {}]
  %s1 = inlined_call_operand.hbm [shape: f32[4,1,128], index: 1, kind: input, shape index: {}]
  %s2 = inlined_call_operand.vmem [shape: f32[2,1], index: 2, kind: output, shape index: {}]
  %s3 = sld [smem:[#allocation0]]
  $region57: #{tpu_custom_call.1} parent=0
    _
  %s5 = ssub.s32 1, %s3
  %s6 = scalar_select 0, %s5, %s3
  $region1: #{tpu_custom_call.1} parent=0
    #allocation3 [shape = 'u8[2048]{0}', space=vmem, size = 0x800, scoped, tag = 'input window, operand 0']
    #allocation4 [shape = 's32[2]{0}', space=sflag, size = 0x8, scoped, tag = 'scoped memory for tpu_custom_call.1']
    #allocation5 [shape = 'u8[2048]{0}', space=vmem, size = 0x800, scoped, tag = 'input window, operand 1, single buffered']
    #allocation6 [shape = 's32[1]{0}', space=sflag, size = 0x4, scoped, tag = 'scoped memory for tpu_custom_call.1']
    %7 = vsyncpa [#allocation4], 0
    %s8 = scalar_lea.sflag [#allocation4], 1
    %9 = vsyncpa %s8, 0
    %10 = vsyncpa [#allocation6], 0
    loop: start=0, step=1, limit=6
    $region2: #{tpu_custom_call.1} parent=1 // loop_pre_header
      _
    $region3: #{tpu_custom_call.1} parent=1 // loop_header
      %s12 = sphi 0, %s16
      %p13 = scmp.ge.s32.totalorder %s12, 6
      %s19 = sphi 0, %s31
      %s20 = sphi 0, %s27
      %s21 = sphi 0, %s19
      %s22 = sphi 0, %s20
      %s23 = sphi 0, %s21
      %s24 = sphi 0, %s22
      %s36 = sphi 0, %s38
      %s39 = sphi 0, %s36
      %s40 = sphi 0, %s39
      %s56 = sphi 0, %s40
      %s60 = sphi 0, %s60
      %s62 = sphi 0, %s60
      %s63 = sphi 0, %s62
      %s77 = sphi 0, %s63
      %s83 = sphi 0, %s85
      %s86 = sphi 0, %s83
      %s87 = sphi 0, %s86
      %s103 = sphi 0, %s87
    $region4: #{tpu_custom_call.1} parent=1 // loop_header_branch
      %15 = sbr.rel (%p13) target = $region8
    $region5: #{tpu_custom_call.1} parent=1 // loop_body
      %s17 = ssub.s32 %s12, 1
      %s18 = ssub.s32 %s12, 2
      %s25 = sadd.s32 1, %s20
      %p26 = scmp.ge.s32.totalorder %s25, 4
      %s27 = scalar_select %p26, 0, %s25
      %s28 = sadd.s32 1, %s19
      %s29 = scalar_select %p26, %s28, %s19
      %p30 = scmp.ge.s32.totalorder %s29, 1
      %s31 = scalar_select %p30, 0, %s29
      %s32 = ssub.s32 %s19, %s31
      %s33 = ssub.s32 %s20, %s27
      %s34 = sor.u32 %s32, %s33
      %p35 = scmp.eq.s32.totalorder %s34, 0
      %s37 = sadd.s32 %s36, 1
      %s38 = scalar_select %p35, %s36, %s37
      %p41 = pneg %p35
      %p42 = scmp.eq.s32.totalorder %s12, 3
      %p43 = por %p41, %p42
      %p44 = scmp.ne.s32.totalorder %s36, %s39
      %p45 = scmp.eq.s32.totalorder %s12, 0
      %p46 = por %p44, %p45
      %p47 = scmp.ne.s32.totalorder %s36, %s39
      %p48 = scmp.eq.s32.totalorder %s17, 3
      %p49 = por %p47, %p48
      %p50 = scmp.ne.s32.totalorder %s39, %s40
      %p51 = scmp.eq.s32.totalorder %s17, 0
      %p52 = por %p50, %p51
      %p53 = scmp.ne.s32.totalorder %s39, %s40
      %p54 = scmp.eq.s32.totalorder %s18, 3
      %p55 = por %p53, %p54
      %p57 = scmp.ne.s32.totalorder %s40, %s56
      %p58 = scmp.eq.s32.totalorder %s18, 0
      %p59 = por %p57, %p58
      %s61 = sadd.s32 %s60, 1
      %p64 = scmp.eq.s32.totalorder %s12, 3
      %p65 = scmp.ne.s32.totalorder %s60, %s62
      %p66 = scmp.eq.s32.totalorder %s12, 0
      %p67 = por %p65, %p66
      %p68 = scmp.ne.s32.totalorder %s60, %s62
      %p69 = scmp.eq.s32.totalorder %s17, 3
      %p70 = por %p68, %p69
      %p71 = scmp.ne.s32.totalorder %s62, %s63
      %p72 = scmp.eq.s32.totalorder %s17, 0
      %p73 = por %p71, %p72
      %p74 = scmp.ne.s32.totalorder %s62, %s63
      %p75 = scmp.eq.s32.totalorder %s18, 3
      %p76 = por %p74, %p75
      %p78 = scmp.ne.s32.totalorder %s63, %s77
      %p79 = scmp.eq.s32.totalorder %s18, 0
      %p80 = por %p78, %p79
      %s81 = ssub.s32 %s19, %s31
      %p82 = scmp.eq.s32.totalorder %s81, 0
      %s84 = sadd.s32 %s83, 1
      %s85 = scalar_select %p82, %s83, %s84
      %p88 = pneg %p82
      %p89 = scmp.eq.s32.totalorder %s12, 3
      %p90 = por %p88, %p89
      %p91 = scmp.ne.s32.totalorder %s83, %s86
      %p92 = scmp.eq.s32.totalorder %s12, 0
      %p93 = por %p91, %p92
      %p94 = scmp.ne.s32.totalorder %s83, %s86
      %p95 = scmp.eq.s32.totalorder %s17, 3
      %p96 = por %p94, %p95
      %p97 = scmp.ne.s32.totalorder %s86, %s87
      %p98 = scmp.eq.s32.totalorder %s17, 0
      %p99 = por %p97, %p98
      %p100 = scmp.ne.s32.totalorder %s86, %s87
      %p101 = scmp.eq.s32.totalorder %s18, 3
      %p102 = por %p100, %p101
      %p104 = scmp.ne.s32.totalorder %s87, %s103
      %p105 = scmp.eq.s32.totalorder %s18, 0
      %p106 = por %p104, %p105
      %p107 = scmp.le.s32.totalorder 1, %s12
      %p108 = scmp.lt.s32.totalorder %s12, 5
      %p109 = pnand %p107, %p108
      %p110 = pneg %p109
      // Predicated region
      $region9: #{tpu_custom_call.1} parent=5 // pred_check
        _
      $region10: #{tpu_custom_call.1} parent=5 // pred_check_branch
        %112 = sbr.rel (%p109) target = $region12
      $region11: #{tpu_custom_call.1} parent=5 // pred_region
        %s113 = ssub.s32 %s12, 1
        // Predicated region
        $region13: #{tpu_custom_call.1} parent=11 // pred_check
          %p114 = pneg %p73
        $region14: #{tpu_custom_call.1} parent=11 // pred_check_branch
          %116 = sbr.rel (%p114) target = $region16
        $region15: #{tpu_custom_call.1} parent=11 // pred_region
          %s118 = ssub.s32 64, 64
          %119 = vsyncadd [#allocation6], %s118
          %s120 = sshll.u32 [#allocation5], 4
          %s121 = int_to_ptr.vmem [resolvable:$true] %s120
          %126 = dma.hbm_to_vmem [thread:$0]  %s1, 64, %s121, [#allocation6], 16, 16, 1
        $region16: #{tpu_custom_call.1} parent=11 // pred_fallthru
          _
      $region12: #{tpu_custom_call.1} parent=5 // pred_fallthru
        _
      %p127 = scmp.lt.s32.totalorder %s12, 4
      // Predicated region
      $region17: #{tpu_custom_call.1} parent=5 // pred_check
        %p128 = pneg %p127
      $region18: #{tpu_custom_call.1} parent=5 // pred_check_branch
        %130 = sbr.rel (%p128) target = $region20
      $region19: #{tpu_custom_call.1} parent=5 // pred_region
        // Predicated region
        $region21: #{tpu_custom_call.1} parent=19 // pred_check
          %p131 = pneg %p46
        $region22: #{tpu_custom_call.1} parent=19 // pred_check_branch
          %133 = sbr.rel (%p131) target = $region24
        $region23: #{tpu_custom_call.1} parent=19 // pred_region
          %s134 = sand.u32 %s36, 1
          %s135 = scalar_lea.sflag [#allocation4], %s134
          %s136 = sand.u32 %s36, 1
          %s137 = smul.addr %s136, 2
          %s138 = scalar_lea.vmem [#allocation3], %s137
          %s140 = ssub.s32 32, 32
          %141 = vsyncadd %s135, %s140
          %s142 = smul.addr %s19, 4
          %s143 = sadd.s32 %s20, %s142
          %s144 = smul.addr %s143, 32
          %s145 = scalar_lea.hbm %s0, %s144
          %s147 = sshll.u32 %s138, 4
          %s148 = int_to_ptr.vmem [resolvable:$true] %s147
          %150 = dma.hbm_to_vmem [thread:$0]  %s145, 32, %s148, %s135
        $region24: #{tpu_custom_call.1} parent=19 // pred_fallthru
          _
      $region20: #{tpu_custom_call.1} parent=5 // pred_fallthru
        _
      %p151 = scmp.le.s32.totalorder 1, %s12
      %p152 = scmp.lt.s32.totalorder %s12, 5
      %p153 = pnand %p151, %p152
      %p154 = pneg %p153
      // Predicated region
      $region25: #{tpu_custom_call.1} parent=5 // pred_check
        _
      $region26: #{tpu_custom_call.1} parent=5 // pred_check_branch
        %156 = sbr.rel (%p153) target = $region28
      $region27: #{tpu_custom_call.1} parent=5 // pred_region
        %s157 = ssub.s32 %s12, 1
        %s158 = sand.u32 %s39, 1
        %s159 = scalar_lea.sflag [#allocation4], %s158
        %s160 = sand.u32 %s39, 1
        %s161 = smul.addr %s160, 2
        %s162 = scalar_lea.vmem [#allocation3], %s161
        // Predicated region
        $region29: #{tpu_custom_call.1} parent=27 // pred_check
          %p163 = pneg %p52
        $region30: #{tpu_custom_call.1} parent=27 // pred_check_branch
          %165 = sbr.rel (%p163) target = $region32
        $region31: #{tpu_custom_call.1} parent=27 // pred_region
          %166 = dma.done %s159, 32
        $region32: #{tpu_custom_call.1} parent=27 // pred_fallthru
          _
        // Predicated region
        $region33: #{tpu_custom_call.1} parent=27 // pred_check
          %p167 = pneg %p73
        $region34: #{tpu_custom_call.1} parent=27 // pred_check_branch
          %169 = sbr.rel (%p167) target = $region36
        $region35: #{tpu_custom_call.1} parent=27 // pred_region
          %170 = dma.done [#allocation6], 64
        $region36: #{tpu_custom_call.1} parent=27 // pred_fallthru
          _
        %s171 = sand.u32 %s39, 1
        %s172 = scalar_lea.sflag [#allocation4], %s171
        %s173 = sand.u32 %s39, 1
        %s174 = smul.addr %s173, 2
        %s175 = scalar_lea.vmem [#allocation3], %s174
        %p176 = pneg %p52
        %p177 = pneg %p49
        %p178 = pneg %p73
        %p179 = pneg %p70
        %p180 = pneg %p99
        %p181 = pneg %p96
        %p182 = scmp.lt.s32.totalorder %s21, 0
        %s183 = scalar_select %p182, %s21, 0
        %s184 = smul.addr %s183, 2
        %s185 = scalar_lea.vmem %s2, %s184
        %p186 = scmp.lt.s32.totalorder %s21, 0
        %s187 = scalar_select %p186, %s21, 0
        %s188 = smul.addr %s187, 2
        %s189 = scalar_lea.vmem %s2, %s188
        %p190 = scmp.eq.s32.totalorder %s22, 0
        // Predicated region
        $region37: #{tpu_custom_call.1} parent=27 // pred_check
          %p191 = pneg %p190
        $region38: #{tpu_custom_call.1} parent=27 // pred_check_branch
          %193 = sbr.rel (%p191) target = $region40
        $region39: #{tpu_custom_call.1} parent=27 // pred_region
          %194 = vst [vmem:[#allocation2] sm:$0x3] 0.0
        $region40: #{tpu_custom_call.1} parent=27 // pred_fallthru
          _
        %v195 = vld [vmem:[%s162] sm:$0x3]
        %s196 = scalar_lea.vmem [#allocation5], %s22
        %v197 = vld [vmem:[%s196] sm:$0x1]
        %v199 = vlaneseq
        %v200 = vshrl.u32 %v199, 7
        %v201 = vsub.s32 0, %v200
        %v202 = vrot.slane %v197, %v201
        %v204 = vmul.f32 %v195, %v202
        %v205 = vld [vmem:[#allocation2] sm:$0x3]
        %v206 = vadd.f32 %v205, %v204
        %207 = vst [vmem:[#allocation2] sm:$0x3] %v206
        %p208 = scmp.eq.s32.totalorder %s22, 3
        // Predicated region
        $region41: #{tpu_custom_call.1} parent=27 // pred_check
          %p209 = pneg %p208
        $region42: #{tpu_custom_call.1} parent=27 // pred_check_branch
          %211 = sbr.rel (%p209) target = $region44
        $region43: #{tpu_custom_call.1} parent=27 // pred_region
          %v212 = vld [vmem:[#allocation2] sm:$0x3]
          %vm213 = vcmask 1041408
          %v214 = vsel %vm213, %v212, 0.0
          %215 = vadd.xlane.f32.xlu0 %v214
          %v216 = vpop.xlane.xlu0 %215
          %v217 = vmax.f32 %v216, 0.0
          %vm218 = vcmask 1024
          %219 = vst.msk [vmem:[%s189] sm:$0x3] %vm218, %v217
        $region44: #{tpu_custom_call.1} parent=27 // pred_fallthru
          _
        %p220 = scmp.lt.s32.totalorder %s21, 0
        %s221 = scalar_select %p220, %s21, 0
        %s222 = smul.addr %s221, 2
        %s223 = scalar_lea.vmem %s2, %s222
        // Predicated region
        $region45: #{tpu_custom_call.1} parent=27 // pred_check
          %p224 = pneg %p96
        $region46: #{tpu_custom_call.1} parent=27 // pred_check_branch
          %226 = sbr.rel (%p224) target = $region48
        $region47: #{tpu_custom_call.1} parent=27 // pred_region
          _
        $region48: #{tpu_custom_call.1} parent=27 // pred_fallthru
          _
        // Predicated region
        $region49: #{tpu_custom_call.1} parent=27 // pred_check
          %p227 = pneg %p96
        $region50: #{tpu_custom_call.1} parent=27 // pred_check_branch
          %229 = sbr.rel (%p227) target = $region52
        $region51: #{tpu_custom_call.1} parent=27 // pred_region
          %p230 = scmp.lt.s32.totalorder %s21, 0
          %s231 = scalar_select %p230, %s21, 0
          %s232 = smul.addr %s231, 2
          %s233 = scalar_lea.vmem %s2, %s232
        $region52: #{tpu_custom_call.1} parent=27 // pred_fallthru
          _
      $region28: #{tpu_custom_call.1} parent=5 // pred_fallthru
        _
      %p234 = scmp.le.s32.totalorder 2, %s12
      // Predicated region
      $region53: #{tpu_custom_call.1} parent=5 // pred_check
        %p235 = pneg %p234
      $region54: #{tpu_custom_call.1} parent=5 // pred_check_branch
        %237 = sbr.rel (%p235) target = $region56
      $region55: #{tpu_custom_call.1} parent=5 // pred_region
        %s238 = ssub.s32 %s12, 2
      $region56: #{tpu_custom_call.1} parent=5 // pred_fallthru
        _
    $region6: #{tpu_custom_call.1} parent=1 // loop_footer
      %s16 = sadd.s32 1, %s12
    $region7: #{tpu_custom_call.1} parent=1 // loop_footer_branch
      %11 = sbr.rel target = $region3
    $region8: #{tpu_custom_call.1} parent=1 // loop_exit
      _
    %239 = vsyncpa [#allocation4], 1
    %s240 = scalar_lea.sflag [#allocation4], 1
    %241 = vsyncpa %s240, 1
    %242 = vsyncpa [#allocation6], 1

</llo_original>
